<compile_context>
chip_gen: v5e
topology: v5e:2x2
jax: 0.10.0
libtpu: 0.0.40
codegen_flags: <defaults>
</compile_context>

<pallas_src>
import functools
import math

import jax
import jax.numpy as jnp
from jax.experimental import pallas as pl
from jax.experimental.pallas import tpu as pltpu


def _weighted_loss_kernel(w_ref, o_ref, t_ref, out_ref, acc_ref, *, loss_type):
    # grid = (core_split, n_k); axis 0 is parallel (megacore), axis 1 reduction.
    k = pl.program_id(1)

    @pl.when(k == 0)
    def _():
        acc_ref[...] = jnp.zeros_like(acc_ref)

    o = o_ref[...].astype(jnp.float32)
    t = t_ref[...].astype(jnp.float32)
    d = o - t
    if loss_type == "mse":
        loss = d * d
    elif loss_type == "l1":
        loss = jnp.abs(d)
    else:
        raise ValueError(f"unsupported loss_type: {loss_type}")

    # Pure elementwise VPU work per step; (1, L) weight row broadcasts over
    # sublanes. No cross-lane reduction on the per-step critical path.
    acc_ref[...] += loss * w_ref[...]

    @pl.when(k == pl.num_programs(1) - 1)
    def _():
        s = jnp.sum(acc_ref[...])                    # one XLU reduce at the end
        out_ref[...] = jnp.zeros_like(out_ref) + s   # lane-dense broadcast write


def _round_up(x, m):
    return (x + m - 1) // m * m


def weighted_loss(output, target, *, loss_type, split_ratio, weights,
                  target_block_bytes=2 * 1024 * 1024, core_split=2):
    """Pallas TPU implementation of WeightedLoss.forward (returns scalar f32)."""
    assert output.shape == target.shape
    B, C, H, W = output.shape
    total = B * C * H * W

    split_pct = split_ratio[0] / sum(split_ratio)
    split_col = int(W * split_pct)

    # Lane-dense last dim: multiple of 128 and of W (weight period).
    L = W * 128 // math.gcd(W, 128)

    # Precomputed per-lane weight row (periodic in W along the lane axis).
    col_in_w = jnp.arange(L, dtype=jnp.int32) % W
    w_row = jnp.where(col_in_w >= split_col,
                      jnp.float32(weights[0]),
                      jnp.float32(weights[1])).reshape(1, L)

    # Row tiling: multiple of 8 sublanes, capped by a per-block byte budget.
    rows = -(-total // L)                                   # cdiv
    max_rows = max(8, (target_block_bytes // (4 * L)) // 8 * 8)
    row_tile = min(max_rows, _round_up(rows, 8))
    rows_padded = _round_up(rows, core_split * row_tile)
    n_k = rows_padded // (core_split * row_tile)

    # Flatten + zero-pad; padded elements contribute 0 to the weighted sum.
    pad = rows_padded * L - total
    o2 = jnp.pad(output.reshape(-1), (0, pad)).reshape(rows_padded, L)
    t2 = jnp.pad(target.reshape(-1), (0, pad)).reshape(rows_padded, L)

    kernel = functools.partial(_weighted_loss_kernel, loss_type=loss_type)

    out = pl.pallas_call(
        kernel,
        out_shape=jax.ShapeDtypeStruct((core_split * 8, 128), jnp.float32),
        grid_spec=pltpu.PrefetchScalarGridSpec(
            num_scalar_prefetch=0,
            grid=(core_split, n_k),
            in_specs=[
                pl.BlockSpec((1, L), lambda p, k: (0, 0)),          # weights
                pl.BlockSpec((row_tile, L), lambda p, k: (p * n_k + k, 0)),
                pl.BlockSpec((row_tile, L), lambda p, k: (p * n_k + k, 0)),
            ],
            out_specs=pl.BlockSpec((8, 128), lambda p, k: (p, 0)),
            scratch_shapes=[pltpu.VMEM((row_tile, L), jnp.float32)],
        ),
        compiler_params=pltpu.CompilerParams(
            dimension_semantics=("parallel", "arbitrary"),
            vmem_limit_bytes=32 * 1024 * 1024,
        ),
    )(w_row, o2, t2)

    partials = out[::8, 0]        # one broadcast partial sum per core slice
    return jnp.sum(partials) / jnp.float32(total)


def _reference(output, target, *, loss_type, split_ratio, weights):
    split_pct = split_ratio[0] / sum(split_ratio)
    split_col = int(output.shape[-1] * split_pct)
    d = output.astype(jnp.float32) - target.astype(jnp.float32)
    loss = d * d if loss_type == "mse" else jnp.abs(d)
    loss = loss.at[:, :, :, split_col:].multiply(weights[0])
    loss = loss.at[:, :, :, :split_col].multiply(weights[1])
    return jnp.mean(loss)


if __name__ == "__main__":
    # Deterministic "parameters" of the module (set in __init__ in PyTorch).
    split_ratio = (3, 1)
    weights = (2.0, 0.5)

    key = jax.random.PRNGKey(0)
    k1, k2 = jax.random.split(key)
    B, C, H, W = 2, 4, 16, 16
    output = jax.random.normal(k1, (B, C, H, W), dtype=jnp.float32)
    target = jax.random.normal(k2, (B, C, H, W), dtype=jnp.float32)

    for loss_type in ("mse", "l1"):
        got = weighted_loss(output, target, loss_type=loss_type,
                            split_ratio=split_ratio, weights=weights)
        got = jax.block_until_ready(got)
        want = _reference(output, target, loss_type=loss_type,
                          split_ratio=split_ratio, weights=weights)
        assert jnp.allclose(got, want, rtol=1e-5, atol=1e-6), (loss_type, got, want)

    print("KERNEL_OK")
</pallas_src>

<mosaic_0001>
module attributes {stable_mosaic.version = 11 : i64} {
  func.func @_weighted_loss_kernel(%arg0: i32, %arg1: i32, %arg2: memref<1x128xf32, #tpu.memory_space<vmem>>, %arg3: memref<16x128xf32, #tpu.memory_space<vmem>>, %arg4: memref<16x128xf32, #tpu.memory_space<vmem>>, %arg5: memref<8x128xf32, #tpu.memory_space<vmem>>, %arg6: memref<16x128xf32, #tpu.memory_space<vmem>>) attributes {dimension_semantics = [#tpu.dimension_semantics<parallel>, #tpu.dimension_semantics<arbitrary>], iteration_bounds = array<i64: 2, 1>, scalar_prefetch = 0 : i64, scratch_operands = 1 : i64, tpu.core_type = #tpu.core_type<tc>, window_params = [{pipeline_mode = #tpu.pipeline_mode<synchronous>, transform_indices = @transform_0, window_bounds = array<i64: 1, 128>}, {transform_indices = @transform_1, window_bounds = array<i64: 16, 128>}, {transform_indices = @transform_2, window_bounds = array<i64: 16, 128>}, {transform_indices = @transform_3, window_bounds = array<i64: 8, 128>}]} {
    %c0_i32 = arith.constant 0 : i32
    %0 = arith.cmpi eq, %arg1, %c0_i32 : i32
    %1 = arith.extui %0 : i1 to i32
    %c0_i32_0 = arith.constant 0 : i32
    %2 = arith.cmpi ne, %1, %c0_i32_0 : i32
    scf.if %2 {
      %cst = arith.constant 0.000000e+00 : f32
      %16 = vector.broadcast %cst : f32 to vector<16x128xf32>
      %c0_12 = arith.constant 0 : index
      %c0_13 = arith.constant 0 : index
      %17 = vector.load %arg6[%c0_12, %c0_13] : memref<16x128xf32, #tpu.memory_space<vmem>>, vector<16x128xf32>
      tpu.vector_store %arg6[%c0_12, %c0_13], %16 {strides = array<i32>} : memref<16x128xf32, #tpu.memory_space<vmem>>, vector<16x128xf32>,
    } else {
    }
    %c0 = arith.constant 0 : index
    %c0_1 = arith.constant 0 : index
    %3 = vector.load %arg3[%c0, %c0_1] : memref<16x128xf32, #tpu.memory_space<vmem>>, vector<16x128xf32>
    %c0_2 = arith.constant 0 : index
    %c0_3 = arith.constant 0 : index
    %4 = vector.load %arg4[%c0_2, %c0_3] : memref<16x128xf32, #tpu.memory_space<vmem>>, vector<16x128xf32>
    %5 = arith.subf %3, %4 : vector<16x128xf32>
    %6 = arith.mulf %5, %5 : vector<16x128xf32>
    %c0_4 = arith.constant 0 : index
    %c0_5 = arith.constant 0 : index
    %7 = vector.load %arg6[%c0_4, %c0_5] : memref<16x128xf32, #tpu.memory_space<vmem>>, vector<16x128xf32>
    %c0_6 = arith.constant 0 : index
    %c0_7 = arith.constant 0 : index
    %8 = vector.load %arg2[%c0_6, %c0_7] : memref<1x128xf32, #tpu.memory_space<vmem>>, vector<1x128xf32>
    %9 = vector.broadcast %8 : vector<1x128xf32> to vector<16x128xf32>
    %10 = arith.mulf %6, %9 : vector<16x128xf32>
    %11 = arith.addf %7, %10 : vector<16x128xf32>
    %c0_8 = arith.constant 0 : index
    %c0_9 = arith.constant 0 : index
    %12 = vector.load %arg6[%c0_8, %c0_9] : memref<16x128xf32, #tpu.memory_space<vmem>>, vector<16x128xf32>
    tpu.vector_store %arg6[%c0_8, %c0_9], %11 {strides = array<i32>} : memref<16x128xf32, #tpu.memory_space<vmem>>, vector<16x128xf32>,
    %c0_i32_10 = arith.constant 0 : i32
    %13 = arith.cmpi eq, %arg1, %c0_i32_10 : i32
    %14 = arith.extui %13 : i1 to i32
    %c0_i32_11 = arith.constant 0 : i32
    %15 = arith.cmpi ne, %14, %c0_i32_11 : i32
    scf.if %15 {
      %c0_12 = arith.constant 0 : index
      %c0_13 = arith.constant 0 : index
      %16 = vector.load %arg6[%c0_12, %c0_13] : memref<16x128xf32, #tpu.memory_space<vmem>>, vector<16x128xf32>
      %17 = vector.shape_cast %16 : vector<16x128xf32> to vector<1x16x128xf32>
      %cst = arith.constant dense<0.000000e+00> : vector<1xf32>
      %18 = vector.multi_reduction <add>, %17, %cst [1, 2] : vector<1x16x128xf32> to vector<1xf32>
      %19 = vector.shape_cast %18 : vector<1xf32> to vector<1x1x1xf32>
      %20 = vector.extract %19[0, 0, 0] : f32 from vector<1x1x1xf32>
      %cst_14 = arith.constant 0.000000e+00 : f32
      %21 = vector.broadcast %cst_14 : f32 to vector<8x128xf32>
      %22 = vector.broadcast %20 : f32 to vector<8x128xf32>
      %23 = arith.addf %21, %22 : vector<8x128xf32>
      %c0_15 = arith.constant 0 : index
      %c0_16 = arith.constant 0 : index
      %24 = vector.load %arg5[%c0_15, %c0_16] : memref<8x128xf32, #tpu.memory_space<vmem>>, vector<8x128xf32>
      tpu.vector_store %arg5[%c0_15, %c0_16], %23 {strides = array<i32>} : memref<8x128xf32, #tpu.memory_space<vmem>>, vector<8x128xf32>,
    } else {
    }
    return
  }
  func.func @transform_0(%arg0: i32, %arg1: i32) -> (i32, i32) {
    %c0_i32 = arith.constant 0 : i32
    %c0_i32_0 = arith.constant 0 : i32
    %c0_i32_1 = arith.constant 0 : i32
    return %c0_i32, %c0_i32_0 : i32, i32
  }
  func.func @transform_1(%arg0: i32, %arg1: i32) -> (i32, i32) {
    %c1_i32 = arith.constant 1 : i32
    %0 = arith.muli %arg0, %c1_i32 : i32
    %1 = arith.addi %0, %arg1 : i32
    %c0_i32 = arith.constant 0 : i32
    %c0_i32_0 = arith.constant 0 : i32
    return %1, %c0_i32 : i32, i32
  }
  func.func @transform_2(%arg0: i32, %arg1: i32) -> (i32, i32) {
    %c1_i32 = arith.constant 1 : i32
    %0 = arith.muli %arg0, %c1_i32 : i32
    %1 = arith.addi %0, %arg1 : i32
    %c0_i32 = arith.constant 0 : i32
    %c0_i32_0 = arith.constant 0 : i32
    return %1, %c0_i32 : i32, i32
  }
  func.func @transform_3(%arg0: i32, %arg1: i32) -> (i32, i32) {
    %c0_i32 = arith.constant 0 : i32
    %c0_i32_0 = arith.constant 0 : i32
    return %arg0, %c0_i32 : i32, i32
  }
}

</mosaic_0001>

<llo_original>
// kernel: tpu_custom_call.1
$region0: #{tpu_custom_call.1}
  #allocation0 [shape = 'u32[]', space=smem, size = 0x4, offset = 0x4, fixed_abs, tag = 'smem constant byte address 0x4 - core index']
  #allocation1 [shape = 'u32[72,128]{1,0:T(1,128)}', space=vmem, size = 0x9000, scoped, tag = 'internal scratch']
  #allocation2 [shape = 'f32[16,128]{1,0:T(8,128)}', space=vmem, size = 0x2000, scoped, tag = 'scratch operand']
  %s0 = inlined_call_operand.hbm [shape: f32[1,128], index: 0, kind: input, shape index: {}]
  %s1 = inlined_call_operand.hbm [shape: f32[32,128], index: 1, kind: input, shape index: {}]
  %s2 = inlined_call_operand.hbm [shape: f32[32,128], index: 2, kind: input, shape index: {}]
  %s3 = inlined_call_operand.hbm [shape: f32[16,128], index: 3, kind: output, shape index: {}]
  %s4 = sld [smem:[#allocation0]]
  $region65: #{tpu_custom_call.1} parent=0
    _
  %s6 = ssub.s32 1, %s4
  %s7 = scalar_select 0, %s6, %s4
  $region1: #{tpu_custom_call.1} parent=0
    #allocation3 [shape = 'u8[512]{0}', space=vmem, size = 0x400, scoped, tag = 'input window, operand 0, single buffered']
    #allocation4 [shape = 's32[2]{0}', space=sflag, size = 0x8, scoped, tag = 'scoped memory for tpu_custom_call.1']
    #allocation5 [shape = 's32[2]{0}', space=sflag, size = 0x8, scoped, tag = 'scoped memory for tpu_custom_call.1']
    #allocation6 [shape = 'u8[16384]{0}', space=vmem, size = 0x4000, scoped, tag = 'input window, operand 1']
    #allocation7 [shape = 's32[2]{0}', space=sflag, size = 0x8, scoped, tag = 'scoped memory for tpu_custom_call.1']
    #allocation8 [shape = 'u8[16384]{0}', space=vmem, size = 0x4000, scoped, tag = 'input window, operand 2']
    #allocation9 [shape = 'u8[8192]{0}', space=vmem, size = 0x2000, scoped, tag = 'output window, operand 0']
    %8 = vsyncpa [#allocation4], 0
    %9 = vsyncpa [#allocation7], 0
    %s10 = scalar_lea.sflag [#allocation7], 1
    %11 = vsyncpa %s10, 0
    %12 = vsyncpa [#allocation5], 0
    %s13 = scalar_lea.sflag [#allocation5], 1
    %14 = vsyncpa %s13, 0
    loop: start=0, step=1, limit=4
    $region2: #{tpu_custom_call.1} parent=1 // loop_pre_header
      _
    $region3: #{tpu_custom_call.1} parent=1 // loop_header
      %s16 = sphi 0, %s20
      %p17 = scmp.ge.s32.totalorder %s16, 4
      %s23 = sphi 0, %s35
      %s24 = sphi 0, %s31
      %s25 = sphi 0, %s23
      %s26 = sphi 0, %s24
      %s27 = sphi 0, %s25
      %s28 = sphi 0, %s26
      %s36 = sphi 0, %s36
      %s38 = sphi 0, %s36
      %s39 = sphi 0, %s38
      %s53 = sphi 0, %s39
      %s61 = sphi 0, %s63
      %s64 = sphi 0, %s61
      %s65 = sphi 0, %s64
      %s81 = sphi 0, %s65
      %s89 = sphi 0, %s91
      %s92 = sphi 0, %s89
      %s93 = sphi 0, %s92
      %s109 = sphi 0, %s93
      %s115 = sphi 0, %s117
      %s118 = sphi 0, %s115
      %s119 = sphi 0, %s118
      %s135 = sphi 0, %s119
    $region4: #{tpu_custom_call.1} parent=1 // loop_header_branch
      %19 = sbr.rel (%p17) target = $region8
    $region5: #{tpu_custom_call.1} parent=1 // loop_body
      %s21 = ssub.s32 %s16, 1
      %s22 = ssub.s32 %s16, 2
      %s29 = sadd.s32 1, %s24
      %p30 = scmp.ge.s32.totalorder %s29, 1
      %s31 = scalar_select %p30, 0, %s29
      %s32 = sadd.s32 1, %s23
      %s33 = scalar_select %p30, %s32, %s23
      %p34 = scmp.ge.s32.totalorder %s33, 2
      %s35 = scalar_select %p34, 0, %s33
      %s37 = sadd.s32 %s36, 1
      %p40 = scmp.eq.s32.totalorder %s16, 1
      %p41 = scmp.ne.s32.totalorder %s36, %s38
      %p42 = scmp.eq.s32.totalorder %s16, 0
      %p43 = por %p41, %p42
      %p44 = scmp.ne.s32.totalorder %s36, %s38
      %p45 = scmp.eq.s32.totalorder %s21, 1
      %p46 = por %p44, %p45
      %p47 = scmp.ne.s32.totalorder %s38, %s39
      %p48 = scmp.eq.s32.totalorder %s21, 0
      %p49 = por %p47, %p48
      %p50 = scmp.ne.s32.totalorder %s38, %s39
      %p51 = scmp.eq.s32.totalorder %s22, 1
      %p52 = por %p50, %p51
      %p54 = scmp.ne.s32.totalorder %s39, %s53
      %p55 = scmp.eq.s32.totalorder %s22, 0
      %p56 = por %p54, %p55
      %s57 = sadd.s32 %s23, %s24
      %s58 = sadd.s32 %s35, %s31
      %s59 = ssub.s32 %s57, %s58
      %p60 = scmp.eq.s32.totalorder %s59, 0
      %s62 = sadd.s32 %s61, 1
      %s63 = scalar_select %p60, %s61, %s62
      %p66 = pneg %p60
      %p67 = scmp.eq.s32.totalorder %s16, 1
      %p68 = por %p66, %p67
      %p69 = scmp.ne.s32.totalorder %s61, %s64
      %p70 = scmp.eq.s32.totalorder %s16, 0
      %p71 = por %p69, %p70
      %p72 = scmp.ne.s32.totalorder %s61, %s64
      %p73 = scmp.eq.s32.totalorder %s21, 1
      %p74 = por %p72, %p73
      %p75 = scmp.ne.s32.totalorder %s64, %s65
      %p76 = scmp.eq.s32.totalorder %s21, 0
      %p77 = por %p75, %p76
      %p78 = scmp.ne.s32.totalorder %s64, %s65
      %p79 = scmp.eq.s32.totalorder %s22, 1
      %p80 = por %p78, %p79
      %p82 = scmp.ne.s32.totalorder %s65, %s81
      %p83 = scmp.eq.s32.totalorder %s22, 0
      %p84 = por %p82, %p83
      %s85 = sadd.s32 %s23, %s24
      %s86 = sadd.s32 %s35, %s31
      %s87 = ssub.s32 %s85, %s86
      %p88 = scmp.eq.s32.totalorder %s87, 0
      %s90 = sadd.s32 %s89, 1
      %s91 = scalar_select %p88, %s89, %s90
      %p94 = pneg %p88
      %p95 = scmp.eq.s32.totalorder %s16, 1
      %p96 = por %p94, %p95
      %p97 = scmp.ne.s32.totalorder %s89, %s92
      %p98 = scmp.eq.s32.totalorder %s16, 0
      %p99 = por %p97, %p98
      %p100 = scmp.ne.s32.totalorder %s89, %s92
      %p101 = scmp.eq.s32.totalorder %s21, 1
      %p102 = por %p100, %p101
      %p103 = scmp.ne.s32.totalorder %s92, %s93
      %p104 = scmp.eq.s32.totalorder %s21, 0
      %p105 = por %p103, %p104
      %p106 = scmp.ne.s32.totalorder %s92, %s93
      %p107 = scmp.eq.s32.totalorder %s22, 1
      %p108 = por %p106, %p107
      %p110 = scmp.ne.s32.totalorder %s93, %s109
      %p111 = scmp.eq.s32.totalorder %s22, 0
      %p112 = por %p110, %p111
      %s113 = ssub.s32 %s23, %s35
      %p114 = scmp.eq.s32.totalorder %s113, 0
      %s116 = sadd.s32 %s115, 1
      %s117 = scalar_select %p114, %s115, %s116
      %p120 = pneg %p114
      %p121 = scmp.eq.s32.totalorder %s16, 1
      %p122 = por %p120, %p121
      %p123 = scmp.ne.s32.totalorder %s115, %s118
      %p124 = scmp.eq.s32.totalorder %s16, 0
      %p125 = por %p123, %p124
      %p126 = scmp.ne.s32.totalorder %s115, %s118
      %p127 = scmp.eq.s32.totalorder %s21, 1
      %p128 = por %p126, %p127
      %p129 = scmp.ne.s32.totalorder %s118, %s119
      %p130 = scmp.eq.s32.totalorder %s21, 0
      %p131 = por %p129, %p130
      %p132 = scmp.ne.s32.totalorder %s118, %s119
      %p133 = scmp.eq.s32.totalorder %s22, 1
      %p134 = por %p132, %p133
      %p136 = scmp.ne.s32.totalorder %s119, %s135
      %p137 = scmp.eq.s32.totalorder %s22, 0
      %p138 = por %p136, %p137
      %p139 = scmp.le.s32.totalorder 1, %s16
      %p140 = scmp.lt.s32.totalorder %s16, 3
      %p141 = pnand %p139, %p140
      %p142 = pneg %p141
      // Predicated region
      $region9: #{tpu_custom_call.1} parent=5 // pred_check
        _
      $region10: #{tpu_custom_call.1} parent=5 // pred_check_branch
        %144 = sbr.rel (%p141) target = $region12
      $region11: #{tpu_custom_call.1} parent=5 // pred_region
        %s145 = ssub.s32 %s16, 1
        // Predicated region
        $region13: #{tpu_custom_call.1} parent=11 // pred_check
          %p146 = pneg %p49
        $region14: #{tpu_custom_call.1} parent=11 // pred_check_branch
          %148 = sbr.rel (%p146) target = $region16
        $region15: #{tpu_custom_call.1} parent=11 // pred_region
          %150 = vsyncadd [#allocation4], 0
          %s152 = sshll.u32 %s0, 4
          %s153 = int_to_ptr.hbm [resolvable:$true] %s152
          %s154 = sshll.u32 [#allocation3], 4
          %s155 = int_to_ptr.vmem [resolvable:$true] %s154
          %157 = dma.hbm_to_vmem [thread:$0]  %s153, 16, %s155, [#allocation4]
        $region16: #{tpu_custom_call.1} parent=11 // pred_fallthru
          _
      $region12: #{tpu_custom_call.1} parent=5 // pred_fallthru
        _
      %p158 = scmp.lt.s32.totalorder %s16, 2
      // Predicated region
      $region17: #{tpu_custom_call.1} parent=5 // pred_check
        %p159 = pneg %p158
      $region18: #{tpu_custom_call.1} parent=5 // pred_check_branch
        %161 = sbr.rel (%p159) target = $region20
      $region19: #{tpu_custom_call.1} parent=5 // pred_region
        // Predicated region
        $region21: #{tpu_custom_call.1} parent=19 // pred_check
          %p162 = pneg %p71
        $region22: #{tpu_custom_call.1} parent=19 // pred_check_branch
          %164 = sbr.rel (%p162) target = $region24
        $region23: #{tpu_custom_call.1} parent=19 // pred_region
          %s165 = sand.u32 %s16, 1
          %s166 = scalar_lea.sflag [#allocation7], %s165
          %s167 = sand.u32 %s61, 1
          %s168 = smul.addr %s167, 16
          %s169 = scalar_lea.vmem [#allocation6], %s168
          %s170 = sadd.s32 %s23, %s24
          %s171 = smul.u32 2, %s170
          %173 = vsyncadd %s166, 0
          %s174 = smul.addr %s171, 8
          %s175 = scalar_lea.hbm %s1, %s174
          %s176 = sshll.u32 %s175, 4
          %s177 = int_to_ptr.hbm [resolvable:$true] %s176
          %s178 = sshll.u32 %s169, 4
          %s179 = int_to_ptr.vmem [resolvable:$true] %s178
          %184 = dma.hbm_to_vmem [thread:$0]  %s177, 256, %s179, %s166, 128, 128, 8
        $region24: #{tpu_custom_call.1} parent=19 // pred_fallthru
          _
        // Predicated region
        $region25: #{tpu_custom_call.1} parent=19 // pred_check
          %p185 = pneg %p99
        $region26: #{tpu_custom_call.1} parent=19 // pred_check_branch
          %187 = sbr.rel (%p185) target = $region28
        $region27: #{tpu_custom_call.1} parent=19 // pred_region
          %s188 = sand.u32 %s16, 1
          %s189 = scalar_lea.sflag [#allocation7], %s188
          %s190 = sand.u32 %s89, 1
          %s191 = smul.addr %s190, 16
          %s192 = scalar_lea.vmem [#allocation8], %s191
          %s193 = sadd.s32 %s23, %s24
          %s194 = smul.u32 2, %s193
          %196 = vsyncadd %s189, 0
          %s197 = smul.addr %s194, 8
          %s198 = scalar_lea.hbm %s2, %s197
          %s199 = sshll.u32 %s198, 4
          %s200 = int_to_ptr.hbm [resolvable:$true] %s199
          %s201 = sshll.u32 %s192, 4
          %s202 = int_to_ptr.vmem [resolvable:$true] %s201
          %207 = dma.hbm_to_vmem [thread:$0]  %s200, 256, %s202, %s189, 128, 128, 8
        $region28: #{tpu_custom_call.1} parent=19 // pred_fallthru
          _
      $region20: #{tpu_custom_call.1} parent=5 // pred_fallthru
        _
      %p208 = scmp.le.s32.totalorder 1, %s16
      %p209 = scmp.lt.s32.totalorder %s16, 3
      %p210 = pnand %p208, %p209
      %p211 = pneg %p210
      // Predicated region
      $region29: #{tpu_custom_call.1} parent=5 // pred_check
        _
      $region30: #{tpu_custom_call.1} parent=5 // pred_check_branch
        %213 = sbr.rel (%p210) target = $region32
      $region31: #{tpu_custom_call.1} parent=5 // pred_region
        %s214 = ssub.s32 %s16, 1
        // Predicated region
        $region33: #{tpu_custom_call.1} parent=31 // pred_check
          %p215 = pneg %p49
        $region34: #{tpu_custom_call.1} parent=31 // pred_check_branch
          %217 = sbr.rel (%p215) target = $region36
        $region35: #{tpu_custom_call.1} parent=31 // pred_region
          %219 = dma.done [#allocation4], 16
        $region36: #{tpu_custom_call.1} parent=31 // pred_fallthru
          _
        %s220 = sand.u32 %s21, 1
        %s221 = scalar_lea.sflag [#allocation7], %s220
        %s222 = sand.u32 %s64, 1
        %s223 = smul.addr %s222, 16
        %s224 = scalar_lea.vmem [#allocation6], %s223
        // Predicated region
        $region37: #{tpu_custom_call.1} parent=31 // pred_check
          %p225 = pneg %p77
        $region38: #{tpu_custom_call.1} parent=31 // pred_check_branch
          %227 = sbr.rel (%p225) target = $region40
        $region39: #{tpu_custom_call.1} parent=31 // pred_region
          %229 = dma.done %s221, 256
        $region40: #{tpu_custom_call.1} parent=31 // pred_fallthru
          _
        %s230 = sand.u32 %s21, 1
        %s231 = scalar_lea.sflag [#allocation7], %s230
        %s232 = sand.u32 %s92, 1
        %s233 = smul.addr %s232, 16
        %s234 = scalar_lea.vmem [#allocation8], %s233
        // Predicated region
        $region41: #{tpu_custom_call.1} parent=31 // pred_check
          %p235 = pneg %p105
        $region42: #{tpu_custom_call.1} parent=31 // pred_check_branch
          %237 = sbr.rel (%p235) target = $region44
        $region43: #{tpu_custom_call.1} parent=31 // pred_region
          %239 = dma.done %s231, 256
        $region44: #{tpu_custom_call.1} parent=31 // pred_fallthru
          _
        %p240 = pneg %p49
        %p241 = pneg %p46
        %s242 = sand.u32 %s21, 1
        %s243 = scalar_lea.sflag [#allocation7], %s242
        %s244 = sand.u32 %s64, 1
        %s245 = smul.addr %s244, 16
        %s246 = scalar_lea.vmem [#allocation6], %s245
        %p247 = pneg %p77
        %p248 = pneg %p74
        %s249 = sand.u32 %s21, 1
        %s250 = scalar_lea.sflag [#allocation7], %s249
        %s251 = sand.u32 %s92, 1
        %s252 = smul.addr %s251, 16
        %s253 = scalar_lea.vmem [#allocation8], %s252
        %p254 = pneg %p105
        %p255 = pneg %p102
        %p256 = pneg %p131
        %p257 = pneg %p128
        %s258 = sand.u32 %s118, 1
        %s259 = scalar_lea.sflag [#allocation5], %s258
        %s260 = sand.u32 %s118, 1
        %s261 = smul.addr %s260, 8
        %s262 = scalar_lea.vmem [#allocation9], %s261
        %s263 = sadd.s32 %s25, %s26
        %s264 = smul.u32 2, %s263
        %s265 = sadd.s32 %s25, %s26
        %s266 = smul.u32 2, %s265
        %p267 = scmp.eq.s32.totalorder %s26, 0
        // Predicated region
        $region45: #{tpu_custom_call.1} parent=31 // pred_check
          %p268 = pneg %p267
        $region46: #{tpu_custom_call.1} parent=31 // pred_check_branch
          %270 = sbr.rel (%p268) target = $region48
        $region47: #{tpu_custom_call.1} parent=31 // pred_region
          %271 = vst [vmem:[#allocation2] sm:$0xff] 0.0
          %272 = vst [vmem:[#allocation2 + $0x8] sm:$0xff] 0.0
        $region48: #{tpu_custom_call.1} parent=31 // pred_fallthru
          _
        %v273 = vld [vmem:[%s224] sm:$0xff]
        %v274 = vld [vmem:[%s224 + $0x8] sm:$0xff]
        %v275 = vld [vmem:[%s234] sm:$0xff]
        %v276 = vld [vmem:[%s234 + $0x8] sm:$0xff]
        %v277 = vsub.f32 %v273, %v275
        %v278 = vsub.f32 %v274, %v276
        %v279 = vmul.f32 %v277, %v277
        %v280 = vmul.f32 %v278, %v278
        %v281 = vld [vmem:[#allocation2] sm:$0xff]
        %v282 = vld [vmem:[#allocation2 + $0x8] sm:$0xff]
        %v283 = vld [vmem:[#allocation3] sm:$0x1]
        %v285 = vperm.slane %v283, 0
        %v287 = vmul.f32 %v279, %v285
        %v288 = vmul.f32 %v280, %v285
        %v289 = vadd.f32 %v281, %v287
        %v290 = vadd.f32 %v282, %v288
        %291 = vst [vmem:[#allocation2] sm:$0xff] %v289
        %292 = vst [vmem:[#allocation2 + $0x8] sm:$0xff] %v290
        // Predicated region
        $region49: #{tpu_custom_call.1} parent=31 // pred_check
          %p293 = pneg %p267
        $region50: #{tpu_custom_call.1} parent=31 // pred_check_branch
          %295 = sbr.rel (%p293) target = $region52
        $region51: #{tpu_custom_call.1} parent=31 // pred_region
          %v296 = vld [vmem:[#allocation2] sm:$0xff]
          %v297 = vld [vmem:[#allocation2 + $0x8] sm:$0xff]
          %v298 = vadd.f32 %v296, %v297
          %299 = vadd.xlane.f32.xlu0 %v298
          %v300 = vpop.xlane.xlu0 %299
          %v301 = vrot.slane %v300, 4
          %v302 = vadd.f32 %v300, %v301
          %v303 = vrot.slane %v302, 2
          %v304 = vadd.f32 %v302, %v303
          %v305 = vrot.slane %v304, 1
          %v306 = vadd.f32 %v304, %v305
          %s307 = vtos %v306
          %v308 = vstv %s307
          %v309 = vadd.f32 %v308, 0.0
          %310 = vst [vmem:[%s262] sm:$0xff] %v309
        $region52: #{tpu_custom_call.1} parent=31 // pred_fallthru
          _
        %s311 = sand.u32 %s118, 1
        %s312 = scalar_lea.sflag [#allocation5], %s311
        %s313 = sand.u32 %s118, 1
        %s314 = smul.addr %s313, 8
        %s315 = scalar_lea.vmem [#allocation9], %s314
        // Predicated region
        $region53: #{tpu_custom_call.1} parent=31 // pred_check
          %p316 = pneg %p128
        $region54: #{tpu_custom_call.1} parent=31 // pred_check_branch
          %318 = sbr.rel (%p316) target = $region56
        $region55: #{tpu_custom_call.1} parent=31 // pred_region
          %320 = vsyncadd %s312, 0
          %s321 = smul.addr %s25, 8
          %s322 = scalar_lea.hbm %s3, %s321
          %s324 = sshll.u32 %s315, 4
          %s325 = int_to_ptr.vmem [resolvable:$true] %s324
          %s326 = sshll.u32 %s322, 4
          %s327 = int_to_ptr.hbm [resolvable:$true] %s326
          %329 = dma.vmem_to_hbm [thread:$0]  %s325, 128, %s327, %s312
        $region56: #{tpu_custom_call.1} parent=31 // pred_fallthru
          _
      $region32: #{tpu_custom_call.1} parent=5 // pred_fallthru
        _
      %p330 = scmp.le.s32.totalorder 2, %s16
      // Predicated region
      $region57: #{tpu_custom_call.1} parent=5 // pred_check
        %p331 = pneg %p330
      $region58: #{tpu_custom_call.1} parent=5 // pred_check_branch
        %333 = sbr.rel (%p331) target = $region60
      $region59: #{tpu_custom_call.1} parent=5 // pred_region
        %s334 = ssub.s32 %s16, 2
        // Predicated region
        $region61: #{tpu_custom_call.1} parent=59 // pred_check
          %p335 = pneg %p134
        $region62: #{tpu_custom_call.1} parent=59 // pred_check_branch
          %337 = sbr.rel (%p335) target = $region64
        $region63: #{tpu_custom_call.1} parent=59 // pred_region
          %s338 = sand.u32 %s119, 1
          %s339 = scalar_lea.sflag [#allocation5], %s338
          %s340 = sand.u32 %s119, 1
          %s341 = smul.addr %s340, 8
          %s342 = scalar_lea.vmem [#allocation9], %s341
          %344 = dma.done %s339, 128
        $region64: #{tpu_custom_call.1} parent=59 // pred_fallthru
          _
      $region60: #{tpu_custom_call.1} parent=5 // pred_fallthru
        _
    $region6: #{tpu_custom_call.1} parent=1 // loop_footer
      %s20 = sadd.s32 1, %s16
    $region7: #{tpu_custom_call.1} parent=1 // loop_footer_branch
      %15 = sbr.rel target = $region3
    $region8: #{tpu_custom_call.1} parent=1 // loop_exit
      _
    %345 = vsyncpa [#allocation4], 1
    %s346 = scalar_lea.sflag [#allocation4], 1
    %347 = vsyncpa %s346, 1
    %348 = vsyncpa [#allocation7], 1
    %s349 = scalar_lea.sflag [#allocation7], 1
    %350 = vsyncpa %s349, 1
    %351 = vsyncpa [#allocation5], 1
    %s352 = scalar_lea.sflag [#allocation5], 1
    %353 = vsyncpa %s352, 1

</llo_original>
